<compile_context>
chip_gen: v7x
topology: tpu7x:2x2x1
jax: 0.10.0
libtpu: 0.0.40
codegen_flags: <defaults>
</compile_context>

<pallas_src>
import functools

import jax
import jax.numpy as jnp
from jax.experimental import pallas as pl
from jax.experimental.pallas import tpu as pltpu

LANE = 128      # TPU lane width
SUBLANE = 8     # TPU sublane width


def _colon_kernel(x_ref, cw_ref, cb_ref, fw_ref, fb_ref, out_ref, acc_ref,
                  *, inv_hw):
    """One (batch, row-tile) grid step of conv3x3 + ReLU + GAP + fc head.

    x_ref  : (HT+2, W+2, Cin)  haloed, zero-padded NHWC row tile (VMEM)
    cw_ref : (9*Cin, 128)      im2col conv weights (lane-padded Cout)
    cb_ref : (1, 128)          conv bias (f32)
    fw_ref : (128, 128)        classifier weight (lane-padded, transposed)
    fb_ref : (1, 128)          classifier bias (f32)
    out_ref: (8, 128)          sublane-broadcast logits for this batch item
    acc_ref: (1, 128) f32      running GAP sum (VMEM scratch)
    """
    r = pl.program_id(1)

    @pl.when(r == 0)
    def _init():
        acc_ref[...] = jnp.zeros_like(acc_ref)

    x = x_ref[...]                                  # (HT+2, W+2, Cin) f32
    hp, wp, cin = x.shape
    ht, w = hp - 2, wp - 2
    m = ht * w

    # im2col: one (M, 9*Cin) patch matrix -> a single K=9*Cin MXU matmul
    # (replaces nine K=Cin matmuls: 9x fewer MXU pushes / slice copies).
    taps = [x[dy:dy + ht, dx:dx + w, :].reshape(m, cin)
            for dy in range(3) for dx in range(3)]
    patch = jnp.concatenate(taps, axis=-1).astype(cw_ref.dtype)   # (M, 9*Cin)

    conv = jnp.dot(patch, cw_ref[...], preferred_element_type=jnp.float32)
    conv = jnp.maximum(conv + cb_ref[0, :], 0.0)    # f32 bias + ReLU (VPU)

    # Partial global-average-pool as an MXU reduction: (1, M) @ (M, 128).
    ones = jnp.ones((1, m), jnp.float32)
    acc_ref[...] += jnp.dot(ones, conv, preferred_element_type=jnp.float32)

    # Epilogue: classifier head only on the final row tile of this image.
    @pl.when(r == pl.num_programs(1) - 1)
    def _finalize():
        feats = acc_ref[...] * inv_hw               # (1, 128) f32
        logits = jnp.dot(feats.astype(fw_ref.dtype), fw_ref[...],
                         preferred_element_type=jnp.float32) + fb_ref[...]
        # Sublane-broadcast so the store is one full, unmasked (8,128) vst.
        out_ref[...] = jnp.broadcast_to(logits, out_ref.shape).astype(
            out_ref.dtype)


def colon_img_classifier(x_nchw, conv_w, conv_b, fc_w, fc_b, *,
                         row_tile=8, compute_dtype=jnp.float32):
    """x_nchw: (B, Cin, H, W) f32 (PyTorch layout).  conv_w: (3,3,Cin,Cout),
    conv_b: (Cout,), fc_w: (n_class, Cout), fc_b: (n_class,).
    Returns (B, n_class) f32 logits.

    compute_dtype=jnp.bfloat16 narrows only the MXU matmul inputs (recommended
    on v6e/v7x); accumulation and all elementwise work stay f32 (v5e-safe).
    """
    B, Cin, H, W = x_nchw.shape
    Cout = conv_w.shape[-1]
    n_class = fc_w.shape[0]
    assert H % row_tile == 0, "row_tile must divide H"
    HT = row_tile
    NR = H // HT
    K9 = 9 * Cin
    CP = max(LANE, pl.cdiv(Cout, LANE) * LANE)      # lane-padded feature width
    NP = max(LANE, pl.cdiv(n_class, LANE) * LANE)   # lane-padded class width

    # ---- layout prep (outside the kernel) -------------------------------
    # NCHW -> NHWC (lane = channels), zero-pad for 'same' 3x3 conv.
    x_nhwc = jnp.transpose(x_nchw, (0, 2, 3, 1)).astype(jnp.float32)
    x_pad = jnp.pad(x_nhwc, ((0, 0), (1, 1), (1, 1), (0, 0)))
    # Pre-gather overlapping row tiles (+1 halo row each side) so BlockSpec
    # indexing stays purely Blocked and each grid step is double-buffered.
    # TODO(synk): at backbone-scale resolutions build the halo (and the zero
    # padding) in-kernel via masked edge tiles / manual DMA instead of this
    # extra HBM copy.
    x_tiles = jnp.stack(
        [x_pad[:, r * HT:r * HT + HT + 2] for r in range(NR)], axis=1
    )                                               # (B, NR, HT+2, W+2, Cin)

    # im2col conv weight: (3,3,Cin,Cout) -> (9*Cin, CP), zero lane padding.
    w_flat = conv_w.reshape(K9, Cout).astype(compute_dtype)
    cw = jnp.zeros((K9, CP), compute_dtype).at[:, :Cout].set(w_flat)
    cb = jnp.zeros((1, CP), jnp.float32).at[0, :Cout].set(
        conv_b.astype(jnp.float32))
    fw = jnp.zeros((CP, NP), compute_dtype).at[:Cout, :n_class].set(
        fc_w.T.astype(compute_dtype))
    fb = jnp.zeros((1, NP), jnp.float32).at[0, :n_class].set(
        fc_b.astype(jnp.float32))

    kernel = functools.partial(_colon_kernel, inv_hw=1.0 / float(H * W))

    itemsize = jnp.dtype(compute_dtype).itemsize
    flops = (2 * B * H * W * K9 * CP        # conv matmul
             + 2 * B * H * W * CP           # GAP ones-matmul
             + 2 * B * CP * NP)             # classifier head
    bytes_accessed = (int(x_tiles.size) * 4
                      + (K9 * CP + CP * NP) * itemsize
                      + (CP + NP) * 4
                      + B * SUBLANE * NP * 4)

    out = pl.pallas_call(
        kernel,
        out_shape=jax.ShapeDtypeStruct((B, SUBLANE, NP), jnp.float32),
        grid_spec=pltpu.PrefetchScalarGridSpec(
            num_scalar_prefetch=0,
            grid=(B, NR),
            in_specs=[
                # one haloed row tile of one image per grid step
                pl.BlockSpec((None, None, HT + 2, W + 2, Cin),
                             lambda b, r: (b, r, 0, 0, 0)),
                pl.BlockSpec((K9, CP), lambda b, r: (0, 0)),
                pl.BlockSpec((1, CP), lambda b, r: (0, 0)),
                pl.BlockSpec((CP, NP), lambda b, r: (0, 0)),
                pl.BlockSpec((1, NP), lambda b, r: (0, 0)),
            ],
            out_specs=pl.BlockSpec((None, SUBLANE, NP),
                                   lambda b, r: (b, 0, 0)),
            scratch_shapes=[pltpu.VMEM((1, CP), jnp.float32)],
        ),
        compiler_params=pltpu.CompilerParams(
            dimension_semantics=("parallel", "arbitrary"),
            vmem_limit_bytes=32 * 1024 * 1024,
        ),
        cost_estimate=pl.CostEstimate(
            flops=flops, transcendentals=0, bytes_accessed=bytes_accessed),
    )(x_tiles, cw, cb, fw, fb)

    return out[:, 0, :n_class]


def reference_forward(x_nchw, conv_w, conv_b, fc_w, fc_b):
    """Pure-JAX reference of the same forward pass (for verification)."""
    x = jnp.transpose(x_nchw, (0, 2, 3, 1))
    xp = jnp.pad(x, ((0, 0), (1, 1), (1, 1), (0, 0)))
    B, H, W, Cin = x.shape
    Cout = conv_w.shape[-1]
    y = jnp.zeros((B, H, W, Cout), jnp.float32)
    for dy in range(3):
        for dx in range(3):
            y = y + jnp.einsum('bhwc,co->bhwo',
                               xp[:, dy:dy + H, dx:dx + W, :], conv_w[dy, dx])
    y = jax.nn.relu(y + conv_b)
    feats = y.mean(axis=(1, 2))
    return feats @ fc_w.T + fc_b


if __name__ == "__main__":
    # Small shapes consistent with the module: batch=2, channels=4, spatial=16.
    B, Cin, H, W = 2, 4, 16, 16
    Cout, n_class = 32, 2

    key = jax.random.PRNGKey(0)
    kx, kcw, kcb, kfw, kfb = jax.random.split(key, 5)

    x = jax.random.normal(kx, (B, Cin, H, W), dtype=jnp.float32)
    conv_w = jax.random.normal(kcw, (3, 3, Cin, Cout), dtype=jnp.float32) * 0.1
    conv_b = jax.random.normal(kcb, (Cout,), dtype=jnp.float32) * 0.01
    fc_w = jax.random.normal(kfw, (n_class, Cout), dtype=jnp.float32) * 0.1
    fc_b = jax.random.normal(kfb, (n_class,), dtype=jnp.float32) * 0.01

    ref = reference_forward(x, conv_w, conv_b, fc_w, fc_b)

    # f32 matmul path (exact-ish) — strict check.
    out = jax.block_until_ready(
        colon_img_classifier(x, conv_w, conv_b, fc_w, fc_b))
    assert out.shape == (B, n_class), out.shape
    assert jnp.allclose(out, ref, atol=1e-4, rtol=1e-4), (out, ref)

    # bf16 MXU-input path (v6e/v7x throughput) — loose check, f32 accumulation.
    out_bf16 = jax.block_until_ready(
        colon_img_classifier(x, conv_w, conv_b, fc_w, fc_b,
                             compute_dtype=jnp.bfloat16))
    assert out_bf16.shape == (B, n_class), out_bf16.shape
    assert jnp.allclose(out_bf16, ref, atol=1e-1, rtol=1e-1), (out_bf16, ref)

    print("KERNEL_OK")
</pallas_src>

<mosaic_0001>
module attributes {stable_mosaic.version = 11 : i64} {
  func.func @_colon_kernel(%arg0: i32, %arg1: i32, %arg2: memref<1x1x10x18x4xf32, #tpu.memory_space<vmem>>, %arg3: memref<36x128xf32, #tpu.memory_space<vmem>>, %arg4: memref<1x128xf32, #tpu.memory_space<vmem>>, %arg5: memref<128x128xf32, #tpu.memory_space<vmem>>, %arg6: memref<1x128xf32, #tpu.memory_space<vmem>>, %arg7: memref<1x8x128xf32, #tpu.memory_space<vmem>>, %arg8: memref<1x128xf32, #tpu.memory_space<vmem>>) attributes {dimension_semantics = [#tpu.dimension_semantics<parallel>, #tpu.dimension_semantics<arbitrary>], iteration_bounds = array<i64: 2, 2>, scalar_prefetch = 0 : i64, scratch_operands = 1 : i64, tpu.core_type = #tpu.core_type<tc>, window_params = [{transform_indices = @transform_0, window_bounds = array<i64: 1, 1, 10, 18, 4>}, {pipeline_mode = #tpu.pipeline_mode<synchronous>, transform_indices = @transform_1, window_bounds = array<i64: 36, 128>}, {pipeline_mode = #tpu.pipeline_mode<synchronous>, transform_indices = @transform_2, window_bounds = array<i64: 1, 128>}, {pipeline_mode = #tpu.pipeline_mode<synchronous>, transform_indices = @transform_3, window_bounds = array<i64: 128, 128>}, {pipeline_mode = #tpu.pipeline_mode<synchronous>, transform_indices = @transform_4, window_bounds = array<i64: 1, 128>}, {transform_indices = @transform_5, window_bounds = array<i64: 1, 8, 128>}]} {
    %c0_i32 = arith.constant 0 : i32
    %0 = arith.cmpi eq, %arg1, %c0_i32 : i32
    %1 = arith.extui %0 : i1 to i32
    %c0_i32_0 = arith.constant 0 : i32
    %2 = arith.cmpi ne, %1, %c0_i32_0 : i32
    scf.if %2 {
      %cst_17 = arith.constant 0.000000e+00 : f32
      %41 = vector.broadcast %cst_17 : f32 to vector<1x128xf32>
      %c0_18 = arith.constant 0 : index
      %c0_19 = arith.constant 0 : index
      %42 = vector.load %arg8[%c0_18, %c0_19] : memref<1x128xf32, #tpu.memory_space<vmem>>, vector<1x128xf32>
      tpu.vector_store %arg8[%c0_18, %c0_19], %41 {strides = array<i32>} : memref<1x128xf32, #tpu.memory_space<vmem>>, vector<1x128xf32>,
    } else {
    }
    %c0 = arith.constant 0 : index
    %c0_1 = arith.constant 0 : index
    %c0_2 = arith.constant 0 : index
    %c0_3 = arith.constant 0 : index
    %c0_4 = arith.constant 0 : index
    %3 = vector.load %arg2[%c0, %c0_1, %c0_2, %c0_3, %c0_4] : memref<1x1x10x18x4xf32, #tpu.memory_space<vmem>>, vector<1x1x10x18x4xf32>
    %4 = vector.shape_cast %3 : vector<1x1x10x18x4xf32> to vector<10x18x4xf32>
    %5 = vector.extract_strided_slice %4 {offsets = [0, 0, 0], sizes = [8, 16, 4], strides = [1, 1, 1]} : vector<10x18x4xf32> to vector<8x16x4xf32>
    %6 = vector.shape_cast %5 : vector<8x16x4xf32> to vector<128x4xf32>
    %7 = vector.extract_strided_slice %4 {offsets = [0, 1, 0], sizes = [8, 16, 4], strides = [1, 1, 1]} : vector<10x18x4xf32> to vector<8x16x4xf32>
    %8 = vector.shape_cast %7 : vector<8x16x4xf32> to vector<128x4xf32>
    %9 = vector.extract_strided_slice %4 {offsets = [0, 2, 0], sizes = [8, 16, 4], strides = [1, 1, 1]} : vector<10x18x4xf32> to vector<8x16x4xf32>
    %10 = vector.shape_cast %9 : vector<8x16x4xf32> to vector<128x4xf32>
    %11 = vector.extract_strided_slice %4 {offsets = [1, 0, 0], sizes = [8, 16, 4], strides = [1, 1, 1]} : vector<10x18x4xf32> to vector<8x16x4xf32>
    %12 = vector.shape_cast %11 : vector<8x16x4xf32> to vector<128x4xf32>
    %13 = vector.extract_strided_slice %4 {offsets = [1, 1, 0], sizes = [8, 16, 4], strides = [1, 1, 1]} : vector<10x18x4xf32> to vector<8x16x4xf32>
    %14 = vector.shape_cast %13 : vector<8x16x4xf32> to vector<128x4xf32>
    %15 = vector.extract_strided_slice %4 {offsets = [1, 2, 0], sizes = [8, 16, 4], strides = [1, 1, 1]} : vector<10x18x4xf32> to vector<8x16x4xf32>
    %16 = vector.shape_cast %15 : vector<8x16x4xf32> to vector<128x4xf32>
    %17 = vector.extract_strided_slice %4 {offsets = [2, 0, 0], sizes = [8, 16, 4], strides = [1, 1, 1]} : vector<10x18x4xf32> to vector<8x16x4xf32>
    %18 = vector.shape_cast %17 : vector<8x16x4xf32> to vector<128x4xf32>
    %19 = vector.extract_strided_slice %4 {offsets = [2, 1, 0], sizes = [8, 16, 4], strides = [1, 1, 1]} : vector<10x18x4xf32> to vector<8x16x4xf32>
    %20 = vector.shape_cast %19 : vector<8x16x4xf32> to vector<128x4xf32>
    %21 = vector.extract_strided_slice %4 {offsets = [2, 2, 0], sizes = [8, 16, 4], strides = [1, 1, 1]} : vector<10x18x4xf32> to vector<8x16x4xf32>
    %22 = vector.shape_cast %21 : vector<8x16x4xf32> to vector<128x4xf32>
    %23 = tpu.concatenate %6, %8, %10, %12, %14, %16, %18, %20, %22 in 1 : vector<128x4xf32>, vector<128x4xf32>, vector<128x4xf32>, vector<128x4xf32>, vector<128x4xf32>, vector<128x4xf32>, vector<128x4xf32>, vector<128x4xf32>, vector<128x4xf32> -> vector<128x36xf32>
    %c0_5 = arith.constant 0 : index
    %c0_6 = arith.constant 0 : index
    %24 = vector.load %arg3[%c0_5, %c0_6] : memref<36x128xf32, #tpu.memory_space<vmem>>, vector<36x128xf32>
    %cst = arith.constant dense<0.000000e+00> : vector<128x128xf32>
    %25 = tpu.matmul %23, %24, %cst {dimension_numbers = #tpu.dot_dimension_numbers<[1], [0], [0], [1], [0, 0, 1, 1], [], []>} : vector<128x36xf32>, vector<36x128xf32>, vector<128x128xf32> -> vector<128x128xf32>
    %c0_7 = arith.constant 0 : index
    %c0_8 = arith.constant 0 : index
    %26 = vector.load %arg4[%c0_7, %c0_8] : memref<1x128xf32, #tpu.memory_space<vmem>>, vector<1x128xf32>
    %27 = vector.shape_cast %26 : vector<1x128xf32> to vector<128xf32>
    %28 = vector.shape_cast %27 : vector<128xf32> to vector<1x128xf32>
    %29 = vector.broadcast %28 : vector<1x128xf32> to vector<128x128xf32>
    %30 = arith.addf %25, %29 : vector<128x128xf32>
    %cst_9 = arith.constant 0.000000e+00 : f32
    %31 = vector.broadcast %cst_9 : f32 to vector<128x128xf32>
    %32 = arith.maximumf %30, %31 : vector<128x128xf32>
    %cst_10 = arith.constant 1.000000e+00 : f32
    %33 = vector.broadcast %cst_10 : f32 to vector<1x128xf32>
    %c0_11 = arith.constant 0 : index
    %c0_12 = arith.constant 0 : index
    %34 = vector.load %arg8[%c0_11, %c0_12] : memref<1x128xf32, #tpu.memory_space<vmem>>, vector<1x128xf32>
    %cst_13 = arith.constant dense<0.000000e+00> : vector<1x128xf32>
    %35 = tpu.matmul %33, %32, %cst_13 {dimension_numbers = #tpu.dot_dimension_numbers<[1], [0], [0], [1], [0, 0, 1, 1], [], []>} : vector<1x128xf32>, vector<128x128xf32>, vector<1x128xf32> -> vector<1x128xf32>
    %36 = arith.addf %34, %35 : vector<1x128xf32>
    %c0_14 = arith.constant 0 : index
    %c0_15 = arith.constant 0 : index
    %37 = vector.load %arg8[%c0_14, %c0_15] : memref<1x128xf32, #tpu.memory_space<vmem>>, vector<1x128xf32>
    tpu.vector_store %arg8[%c0_14, %c0_15], %36 {strides = array<i32>} : memref<1x128xf32, #tpu.memory_space<vmem>>, vector<1x128xf32>,
    %c1_i32 = arith.constant 1 : i32
    %38 = arith.cmpi eq, %arg1, %c1_i32 : i32
    %39 = arith.extui %38 : i1 to i32
    %c0_i32_16 = arith.constant 0 : i32
    %40 = arith.cmpi ne, %39, %c0_i32_16 : i32
    scf.if %40 {
      %c0_17 = arith.constant 0 : index
      %c0_18 = arith.constant 0 : index
      %41 = vector.load %arg8[%c0_17, %c0_18] : memref<1x128xf32, #tpu.memory_space<vmem>>, vector<1x128xf32>
      %cst_19 = arith.constant 3.906250e-03 : f32
      %42 = vector.broadcast %cst_19 : f32 to vector<1x128xf32>
      %43 = arith.mulf %41, %42 : vector<1x128xf32>
      %c0_20 = arith.constant 0 : index
      %c0_21 = arith.constant 0 : index
      %44 = vector.load %arg5[%c0_20, %c0_21] : memref<128x128xf32, #tpu.memory_space<vmem>>, vector<128x128xf32>
      %cst_22 = arith.constant dense<0.000000e+00> : vector<1x128xf32>
      %45 = tpu.matmul %43, %44, %cst_22 {dimension_numbers = #tpu.dot_dimension_numbers<[1], [0], [0], [1], [0, 0, 1, 1], [], []>} : vector<1x128xf32>, vector<128x128xf32>, vector<1x128xf32> -> vector<1x128xf32>
      %c0_23 = arith.constant 0 : index
      %c0_24 = arith.constant 0 : index
      %46 = vector.load %arg6[%c0_23, %c0_24] : memref<1x128xf32, #tpu.memory_space<vmem>>, vector<1x128xf32>
      %47 = arith.addf %45, %46 : vector<1x128xf32>
      %48 = vector.shape_cast %47 : vector<1x128xf32> to vector<1x128xf32>
      %49 = vector.broadcast %48 : vector<1x128xf32> to vector<8x128xf32>
      %c0_25 = arith.constant 0 : index
      %c0_26 = arith.constant 0 : index
      %c0_27 = arith.constant 0 : index
      %50 = vector.load %arg7[%c0_25, %c0_26, %c0_27] : memref<1x8x128xf32, #tpu.memory_space<vmem>>, vector<1x8x128xf32>
      %51 = vector.shape_cast %50 : vector<1x8x128xf32> to vector<8x128xf32>
      %52 = vector.shape_cast %49 : vector<8x128xf32> to vector<1x8x128xf32>
      tpu.vector_store %arg7[%c0_25, %c0_26, %c0_27], %52 {strides = array<i32>} : memref<1x8x128xf32, #tpu.memory_space<vmem>>, vector<1x8x128xf32>,
    } else {
    }
    return
  }
  func.func @transform_0(%arg0: i32, %arg1: i32) -> (i32, i32, i32, i32, i32) {
    %c0_i32 = arith.constant 0 : i32
    %c0_i32_0 = arith.constant 0 : i32
    %c0_i32_1 = arith.constant 0 : i32
    %c0_i32_2 = arith.constant 0 : i32
    return %arg0, %arg1, %c0_i32, %c0_i32_0, %c0_i32_1 : i32, i32, i32, i32, i32
  }
  func.func @transform_1(%arg0: i32, %arg1: i32) -> (i32, i32) {
    %c0_i32 = arith.constant 0 : i32
    %c0_i32_0 = arith.constant 0 : i32
    %c0_i32_1 = arith.constant 0 : i32
    return %c0_i32, %c0_i32_0 : i32, i32
  }
  func.func @transform_2(%arg0: i32, %arg1: i32) -> (i32, i32) {
    %c0_i32 = arith.constant 0 : i32
    %c0_i32_0 = arith.constant 0 : i32
    %c0_i32_1 = arith.constant 0 : i32
    return %c0_i32, %c0_i32_0 : i32, i32
  }
  func.func @transform_3(%arg0: i32, %arg1: i32) -> (i32, i32) {
    %c0_i32 = arith.constant 0 : i32
    %c0_i32_0 = arith.constant 0 : i32
    %c0_i32_1 = arith.constant 0 : i32
    return %c0_i32, %c0_i32_0 : i32, i32
  }
  func.func @transform_4(%arg0: i32, %arg1: i32) -> (i32, i32) {
    %c0_i32 = arith.constant 0 : i32
    %c0_i32_0 = arith.constant 0 : i32
    %c0_i32_1 = arith.constant 0 : i32
    return %c0_i32, %c0_i32_0 : i32, i32
  }
  func.func @transform_5(%arg0: i32, %arg1: i32) -> (i32, i32, i32) {
    %c0_i32 = arith.constant 0 : i32
    %c0_i32_0 = arith.constant 0 : i32
    %c0_i32_1 = arith.constant 0 : i32
    return %arg0, %c0_i32, %c0_i32_0 : i32, i32, i32
  }
}

</mosaic_0001>

<llo_original>
// kernel: tpu_custom_call.1
$region0: #{tpu_custom_call.1}
  #allocation0 [shape = 'u32[]', space=smem, size = 0x4, offset = 0x4, fixed_abs, tag = 'smem constant byte address 0x4 - core index']
  #allocation1 [shape = 'u32[144,128]{1,0:T(1,128)}', space=vmem, size = 0x12000, scoped, tag = 'internal scratch']
  #allocation2 [shape = 'f32[1,128]{1,0:T(1,128)}', space=vmem, size = 0x200, scoped, tag = 'scratch operand']
  %s0 = inlined_call_operand.vmem [shape: f32[2,2,10,18,4], index: 0, kind: input, shape index: {}]
  %s1 = inlined_call_operand.vmem [shape: f32[36,128], index: 1, kind: input, shape index: {}]
  %s2 = inlined_call_operand.vmem [shape: f32[1,128], index: 2, kind: input, shape index: {}]
  %s3 = inlined_call_operand.vmem [shape: f32[128,128], index: 3, kind: input, shape index: {}]
  %s4 = inlined_call_operand.vmem [shape: f32[1,128], index: 4, kind: input, shape index: {}]
  %s5 = inlined_call_operand.hbm [shape: f32[2,8,128], index: 5, kind: output, shape index: {}]
  %s6 = sld [smem:[#allocation0]]
  $region61: #{tpu_custom_call.1} parent=0
    _
  %s8 = ssub.s32 1, %s6
  %s9 = scalar_select 0, %s8, %s6
  $region1: #{tpu_custom_call.1} parent=0
    #allocation3 [shape = 'u8[8192]{0}', space=vmem, size = 0x2000, scoped, tag = 'output window, operand 0']
    #allocation4 [shape = 's32[2]{0}', space=sflag, size = 0x8, scoped, tag = 'scoped memory for tpu_custom_call.1']
    %10 = vsyncpa [#allocation4], 0
    %s11 = scalar_lea.sflag [#allocation4], 1
    %12 = vsyncpa %s11, 0
    loop: start=0, step=1, limit=6
    $region2: #{tpu_custom_call.1} parent=1 // loop_pre_header
      _
    $region3: #{tpu_custom_call.1} parent=1 // loop_header
      %s14 = sphi 0, %s18
      %p15 = scmp.ge.s32.totalorder %s14, 6
      %s21 = sphi 0, %s33
      %s22 = sphi 0, %s29
      %s23 = sphi 0, %s21
      %s24 = sphi 0, %s22
      %s25 = sphi 0, %s23
      %s26 = sphi 0, %s24
      %s38 = sphi 0, %s40
      %s41 = sphi 0, %s38
      %s42 = sphi 0, %s41
      %s58 = sphi 0, %s42
      %s62 = sphi 0, %s62
      %s64 = sphi 0, %s62
      %s65 = sphi 0, %s64
      %s79 = sphi 0, %s65
      %s83 = sphi 0, %s83
      %s85 = sphi 0, %s83
      %s86 = sphi 0, %s85
      %s100 = sphi 0, %s86
      %s104 = sphi 0, %s104
      %s106 = sphi 0, %s104
      %s107 = sphi 0, %s106
      %s121 = sphi 0, %s107
      %s125 = sphi 0, %s125
      %s127 = sphi 0, %s125
      %s128 = sphi 0, %s127
      %s142 = sphi 0, %s128
      %s148 = sphi 0, %s150
      %s151 = sphi 0, %s148
      %s152 = sphi 0, %s151
      %s168 = sphi 0, %s152
    $region4: #{tpu_custom_call.1} parent=1 // loop_header_branch
      %17 = sbr.rel (%p15) target = $region8
    $region5: #{tpu_custom_call.1} parent=1 // loop_body
      %s19 = ssub.s32 %s14, 1
      %s20 = ssub.s32 %s14, 2
      %s27 = sadd.s32 1, %s22
      %p28 = scmp.ge.s32.totalorder %s27, 2
      %s29 = scalar_select %p28, 0, %s27
      %s30 = sadd.s32 1, %s21
      %s31 = scalar_select %p28, %s30, %s21
      %p32 = scmp.ge.s32.totalorder %s31, 2
      %s33 = scalar_select %p32, 0, %s31
      %s34 = ssub.s32 %s21, %s33
      %s35 = ssub.s32 %s22, %s29
      %s36 = sor.u32 %s34, %s35
      %p37 = scmp.eq.s32.totalorder %s36, 0
      %s39 = sadd.s32 %s38, 1
      %s40 = scalar_select %p37, %s38, %s39
      %p43 = pneg %p37
      %p44 = scmp.eq.s32.totalorder %s14, 3
      %p45 = por %p43, %p44
      %p46 = scmp.ne.s32.totalorder %s38, %s41
      %p47 = scmp.eq.s32.totalorder %s14, 0
      %p48 = por %p46, %p47
      %p49 = scmp.ne.s32.totalorder %s38, %s41
      %p50 = scmp.eq.s32.totalorder %s19, 3
      %p51 = por %p49, %p50
      %p52 = scmp.ne.s32.totalorder %s41, %s42
      %p53 = scmp.eq.s32.totalorder %s19, 0
      %p54 = por %p52, %p53
      %p55 = scmp.ne.s32.totalorder %s41, %s42
      %p56 = scmp.eq.s32.totalorder %s20, 3
      %p57 = por %p55, %p56
      %p59 = scmp.ne.s32.totalorder %s42, %s58
      %p60 = scmp.eq.s32.totalorder %s20, 0
      %p61 = por %p59, %p60
      %s63 = sadd.s32 %s62, 1
      %p66 = scmp.eq.s32.totalorder %s14, 3
      %p67 = scmp.ne.s32.totalorder %s62, %s64
      %p68 = scmp.eq.s32.totalorder %s14, 0
      %p69 = por %p67, %p68
      %p70 = scmp.ne.s32.totalorder %s62, %s64
      %p71 = scmp.eq.s32.totalorder %s19, 3
      %p72 = por %p70, %p71
      %p73 = scmp.ne.s32.totalorder %s64, %s65
      %p74 = scmp.eq.s32.totalorder %s19, 0
      %p75 = por %p73, %p74
      %p76 = scmp.ne.s32.totalorder %s64, %s65
      %p77 = scmp.eq.s32.totalorder %s20, 3
      %p78 = por %p76, %p77
      %p80 = scmp.ne.s32.totalorder %s65, %s79
      %p81 = scmp.eq.s32.totalorder %s20, 0
      %p82 = por %p80, %p81
      %s84 = sadd.s32 %s83, 1
      %p87 = scmp.eq.s32.totalorder %s14, 3
      %p88 = scmp.ne.s32.totalorder %s83, %s85
      %p89 = scmp.eq.s32.totalorder %s14, 0
      %p90 = por %p88, %p89
      %p91 = scmp.ne.s32.totalorder %s83, %s85
      %p92 = scmp.eq.s32.totalorder %s19, 3
      %p93 = por %p91, %p92
      %p94 = scmp.ne.s32.totalorder %s85, %s86
      %p95 = scmp.eq.s32.totalorder %s19, 0
      %p96 = por %p94, %p95
      %p97 = scmp.ne.s32.totalorder %s85, %s86
      %p98 = scmp.eq.s32.totalorder %s20, 3
      %p99 = por %p97, %p98
      %p101 = scmp.ne.s32.totalorder %s86, %s100
      %p102 = scmp.eq.s32.totalorder %s20, 0
      %p103 = por %p101, %p102
      %s105 = sadd.s32 %s104, 1
      %p108 = scmp.eq.s32.totalorder %s14, 3
      %p109 = scmp.ne.s32.totalorder %s104, %s106
      %p110 = scmp.eq.s32.totalorder %s14, 0
      %p111 = por %p109, %p110
      %p112 = scmp.ne.s32.totalorder %s104, %s106
      %p113 = scmp.eq.s32.totalorder %s19, 3
      %p114 = por %p112, %p113
      %p115 = scmp.ne.s32.totalorder %s106, %s107
      %p116 = scmp.eq.s32.totalorder %s19, 0
      %p117 = por %p115, %p116
      %p118 = scmp.ne.s32.totalorder %s106, %s107
      %p119 = scmp.eq.s32.totalorder %s20, 3
      %p120 = por %p118, %p119
      %p122 = scmp.ne.s32.totalorder %s107, %s121
      %p123 = scmp.eq.s32.totalorder %s20, 0
      %p124 = por %p122, %p123
      %s126 = sadd.s32 %s125, 1
      %p129 = scmp.eq.s32.totalorder %s14, 3
      %p130 = scmp.ne.s32.totalorder %s125, %s127
      %p131 = scmp.eq.s32.totalorder %s14, 0
      %p132 = por %p130, %p131
      %p133 = scmp.ne.s32.totalorder %s125, %s127
      %p134 = scmp.eq.s32.totalorder %s19, 3
      %p135 = por %p133, %p134
      %p136 = scmp.ne.s32.totalorder %s127, %s128
      %p137 = scmp.eq.s32.totalorder %s19, 0
      %p138 = por %p136, %p137
      %p139 = scmp.ne.s32.totalorder %s127, %s128
      %p140 = scmp.eq.s32.totalorder %s20, 3
      %p141 = por %p139, %p140
      %p143 = scmp.ne.s32.totalorder %s128, %s142
      %p144 = scmp.eq.s32.totalorder %s20, 0
      %p145 = por %p143, %p144
      %s146 = ssub.s32 %s21, %s33
      %p147 = scmp.eq.s32.totalorder %s146, 0
      %s149 = sadd.s32 %s148, 1
      %s150 = scalar_select %p147, %s148, %s149
      %p153 = pneg %p147
      %p154 = scmp.eq.s32.totalorder %s14, 3
      %p155 = por %p153, %p154
      %p156 = scmp.ne.s32.totalorder %s148, %s151
      %p157 = scmp.eq.s32.totalorder %s14, 0
      %p158 = por %p156, %p157
      %p159 = scmp.ne.s32.totalorder %s148, %s151
      %p160 = scmp.eq.s32.totalorder %s19, 3
      %p161 = por %p159, %p160
      %p162 = scmp.ne.s32.totalorder %s151, %s152
      %p163 = scmp.eq.s32.totalorder %s19, 0
      %p164 = por %p162, %p163
      %p165 = scmp.ne.s32.totalorder %s151, %s152
      %p166 = scmp.eq.s32.totalorder %s20, 3
      %p167 = por %p165, %p166
      %p169 = scmp.ne.s32.totalorder %s152, %s168
      %p170 = scmp.eq.s32.totalorder %s20, 0
      %p171 = por %p169, %p170
      %p172 = scmp.le.s32.totalorder 1, %s14
      %p173 = scmp.lt.s32.totalorder %s14, 5
      %p174 = pnand %p172, %p173
      %p175 = pneg %p174
      // Predicated region
      $region9: #{tpu_custom_call.1} parent=5 // pred_check
        _
      $region10: #{tpu_custom_call.1} parent=5 // pred_check_branch
        %177 = sbr.rel (%p174) target = $region12
      $region11: #{tpu_custom_call.1} parent=5 // pred_region
        %s178 = ssub.s32 %s14, 1
        // Predicated region
        $region13: #{tpu_custom_call.1} parent=11 // pred_check
          %p179 = pneg %p75
        $region14: #{tpu_custom_call.1} parent=11 // pred_check_branch
          %181 = sbr.rel (%p179) target = $region16
        $region15: #{tpu_custom_call.1} parent=11 // pred_region
          _
        $region16: #{tpu_custom_call.1} parent=11 // pred_fallthru
          _
        // Predicated region
        $region17: #{tpu_custom_call.1} parent=11 // pred_check
          %p182 = pneg %p96
        $region18: #{tpu_custom_call.1} parent=11 // pred_check_branch
          %184 = sbr.rel (%p182) target = $region20
        $region19: #{tpu_custom_call.1} parent=11 // pred_region
          _
        $region20: #{tpu_custom_call.1} parent=11 // pred_fallthru
          _
        // Predicated region
        $region21: #{tpu_custom_call.1} parent=11 // pred_check
          %p185 = pneg %p117
        $region22: #{tpu_custom_call.1} parent=11 // pred_check_branch
          %187 = sbr.rel (%p185) target = $region24
        $region23: #{tpu_custom_call.1} parent=11 // pred_region
          _
        $region24: #{tpu_custom_call.1} parent=11 // pred_fallthru
          _
        // Predicated region
        $region25: #{tpu_custom_call.1} parent=11 // pred_check
          %p188 = pneg %p138
        $region26: #{tpu_custom_call.1} parent=11 // pred_check_branch
          %190 = sbr.rel (%p188) target = $region28
        $region27: #{tpu_custom_call.1} parent=11 // pred_region
          _
        $region28: #{tpu_custom_call.1} parent=11 // pred_fallthru
          _
      $region12: #{tpu_custom_call.1} parent=5 // pred_fallthru
        _
      %p191 = scmp.lt.s32.totalorder %s14, 4
      // Predicated region
      $region29: #{tpu_custom_call.1} parent=5 // pred_check
        %p192 = pneg %p191
      $region30: #{tpu_custom_call.1} parent=5 // pred_check_branch
        %194 = sbr.rel (%p192) target = $region32
      $region31: #{tpu_custom_call.1} parent=5 // pred_region
        // Predicated region
        $region33: #{tpu_custom_call.1} parent=31 // pred_check
          %p195 = pneg %p48
        $region34: #{tpu_custom_call.1} parent=31 // pred_check_branch
          %197 = sbr.rel (%p195) target = $region36
        $region35: #{tpu_custom_call.1} parent=31 // pred_region
          %p198 = scmp.lt.s32.totalorder %s21, 1
          %s199 = scalar_select %p198, %s21, 1
          %p200 = scmp.lt.s32.totalorder %s22, 1
          %s201 = scalar_select %p200, %s22, 1
          %s202 = smul.addr %s201, 30
          %s203 = smul.addr %s199, 60
          %s204 = sadd.s32 %s202, %s203
          %s205 = smul.addr %s204, 8
          %s206 = scalar_lea.vmem %s0, %s205
        $region36: #{tpu_custom_call.1} parent=31 // pred_fallthru
          _
      $region32: #{tpu_custom_call.1} parent=5 // pred_fallthru
        _
      %p207 = scmp.le.s32.totalorder 1, %s14
      %p208 = scmp.lt.s32.totalorder %s14, 5
      %p209 = pnand %p207, %p208
      %p210 = pneg %p209
      // Predicated region
      $region37: #{tpu_custom_call.1} parent=5 // pred_check
        _
      $region38: #{tpu_custom_call.1} parent=5 // pred_check_branch
        %212 = sbr.rel (%p209) target = $region40
      $region39: #{tpu_custom_call.1} parent=5 // pred_region
        %s213 = ssub.s32 %s14, 1
        %p214 = scmp.lt.s32.totalorder %s23, 1
        %s215 = scalar_select %p214, %s23, 1
        %p216 = scmp.lt.s32.totalorder %s24, 1
        %s217 = scalar_select %p216, %s24, 1
        %s218 = smul.addr %s217, 30
        %s219 = smul.addr %s215, 60
        %s220 = sadd.s32 %s218, %s219
        %s221 = smul.addr %s220, 8
        %s222 = scalar_lea.vmem %s0, %s221
        %p223 = pneg %p54
        %p224 = pneg %p51
        %p225 = pneg %p75
        %p226 = pneg %p72
        %p227 = pneg %p96
        %p228 = pneg %p93
        %p229 = pneg %p117
        %p230 = pneg %p114
        %p231 = pneg %p138
        %p232 = pneg %p135
        %p233 = pneg %p164
        %p234 = pneg %p161
        %s235 = sand.u32 %s151, 1
        %s236 = scalar_lea.sflag [#allocation4], %s235
        %s237 = sand.u32 %s151, 1
        %s238 = smul.addr %s237, 8
        %s239 = scalar_lea.vmem [#allocation3], %s238
        %p240 = scmp.lt.s32.totalorder %s23, 1
        %s241 = scalar_select %p240, %s23, 1
        %p242 = scmp.lt.s32.totalorder %s24, 1
        %s243 = scalar_select %p242, %s24, 1
        %s244 = smul.addr %s243, 30
        %s245 = smul.addr %s241, 60
        %s246 = sadd.s32 %s244, %s245
        %s247 = smul.addr %s246, 8
        %s248 = scalar_lea.vmem %s0, %s247
        %p249 = scmp.eq.s32.totalorder %s24, 0
        // Predicated region
        $region41: #{tpu_custom_call.1} parent=39 // pred_check
          %p250 = pneg %p249
        $region42: #{tpu_custom_call.1} parent=39 // pred_check_branch
          %252 = sbr.rel (%p250) target = $region44
        $region43: #{tpu_custom_call.1} parent=39 // pred_region
          %253 = vst [vmem:[#allocation2] sm:$0x1] 0.0
        $region44: #{tpu_custom_call.1} parent=39 // pred_fallthru
          _
        %v254 = vld [vmem:[%s248] sm:$0xff]
        %v255 = vld [vmem:[%s248 + $0x8] sm:$0xff]
        %v256 = vld [vmem:[%s248 + $0x10] sm:$0x3]
        %v257 = vld [vmem:[%s248 + $0x18] sm:$0xff]
        %v258 = vld [vmem:[%s248 + $0x20] sm:$0xff]
        %v259 = vld [vmem:[%s248 + $0x28] sm:$0x3]
        %v260 = vld [vmem:[%s248 + $0x30] sm:$0xff]
        %v261 = vld [vmem:[%s248 + $0x38] sm:$0xff]
        %v262 = vld [vmem:[%s248 + $0x40] sm:$0x3]
        %v263 = vld [vmem:[%s248 + $0x48] sm:$0xff]
        %v264 = vld [vmem:[%s248 + $0x50] sm:$0xff]
        %v265 = vld [vmem:[%s248 + $0x58] sm:$0x3]
        %v266 = vld [vmem:[%s248 + $0x60] sm:$0xff]
        %v267 = vld [vmem:[%s248 + $0x68] sm:$0xff]
        %v268 = vld [vmem:[%s248 + $0x70] sm:$0x3]
        %v269 = vld [vmem:[%s248 + $0x78] sm:$0xff]
        %v270 = vld [vmem:[%s248 + $0x80] sm:$0xff]
        %v271 = vld [vmem:[%s248 + $0x88] sm:$0x3]
        %v272 = vld [vmem:[%s248 + $0x90] sm:$0xff]
        %v273 = vld [vmem:[%s248 + $0x98] sm:$0xff]
        %v274 = vld [vmem:[%s248 + $0xa0] sm:$0x3]
        %v275 = vld [vmem:[%s248 + $0xa8] sm:$0xff]
        %v276 = vld [vmem:[%s248 + $0xb0] sm:$0xff]
        %v277 = vld [vmem:[%s248 + $0xb8] sm:$0x3]
        %v278 = vld [vmem:[%s248 + $0xc0] sm:$0xff]
        %v279 = vld [vmem:[%s248 + $0xc8] sm:$0xff]
        %v280 = vld [vmem:[%s248 + $0xd0] sm:$0x3]
        %v281 = vld [vmem:[%s248 + $0xd8] sm:$0xff]
        %v282 = vld [vmem:[%s248 + $0xe0] sm:$0xff]
        %v283 = vld [vmem:[%s248 + $0xe8] sm:$0x3]
        %vm308 = vcmask 1046528
        %v309 = vrot.slane %v254, 1
        %v310 = vrot.slane %v255, 1
        %v311 = vsel %vm308, %v309, %v310
        %v312 = vrot.slane %v256, 1
        %v313 = vsel %vm308, %v310, %v312
        %v314 = vrot.slane %v257, 1
        %v315 = vrot.slane %v258, 1
        %v316 = vsel %vm308, %v314, %v315
        %v317 = vrot.slane %v259, 1
        %v318 = vsel %vm308, %v315, %v317
        %v319 = vrot.slane %v260, 1
        %v320 = vrot.slane %v261, 1
        %v321 = vsel %vm308, %v319, %v320
        %v322 = vrot.slane %v262, 1
        %v323 = vsel %vm308, %v320, %v322
        %v324 = vrot.slane %v263, 1
        %v325 = vrot.slane %v264, 1
        %v326 = vsel %vm308, %v324, %v325
        %v327 = vrot.slane %v265, 1
        %v328 = vsel %vm308, %v325, %v327
        %v329 = vrot.slane %v266, 1
        %v330 = vrot.slane %v267, 1
        %v331 = vsel %vm308, %v329, %v330
        %v332 = vrot.slane %v268, 1
        %v333 = vsel %vm308, %v330, %v332
        %v334 = vrot.slane %v269, 1
        %v335 = vrot.slane %v270, 1
        %v336 = vsel %vm308, %v334, %v335
        %v337 = vrot.slane %v271, 1
        %v338 = vsel %vm308, %v335, %v337
        %v339 = vrot.slane %v272, 1
        %v340 = vrot.slane %v273, 1
        %v341 = vsel %vm308, %v339, %v340
        %v342 = vrot.slane %v274, 1
        %v343 = vsel %vm308, %v340, %v342
        %v344 = vrot.slane %v275, 1
        %v345 = vrot.slane %v276, 1
        %v346 = vsel %vm308, %v344, %v345
        %v347 = vrot.slane %v277, 1
        %v348 = vsel %vm308, %v345, %v347
        %vm349 = vcmask 1045504
        %v350 = vrot.slane %v254, 2
        %v351 = vrot.slane %v255, 2
        %v352 = vsel %vm349, %v350, %v351
        %v353 = vrot.slane %v256, 2
        %v354 = vsel %vm349, %v351, %v353
        %v355 = vrot.slane %v257, 2
        %v356 = vrot.slane %v258, 2
        %v357 = vsel %vm349, %v355, %v356
        %v358 = vrot.slane %v259, 2
        %v359 = vsel %vm349, %v356, %v358
        %v360 = vrot.slane %v260, 2
        %v361 = vrot.slane %v261, 2
        %v362 = vsel %vm349, %v360, %v361
        %v363 = vrot.slane %v262, 2
        %v364 = vsel %vm349, %v361, %v363
        %v365 = vrot.slane %v263, 2
        %v366 = vrot.slane %v264, 2
        %v367 = vsel %vm349, %v365, %v366
        %v368 = vrot.slane %v265, 2
        %v369 = vsel %vm349, %v366, %v368
        %v370 = vrot.slane %v266, 2
        %v371 = vrot.slane %v267, 2
        %v372 = vsel %vm349, %v370, %v371
        %v373 = vrot.slane %v268, 2
        %v374 = vsel %vm349, %v371, %v373
        %v375 = vrot.slane %v269, 2
        %v376 = vrot.slane %v270, 2
        %v377 = vsel %vm349, %v375, %v376
        %v378 = vrot.slane %v271, 2
        %v379 = vsel %vm349, %v376, %v378
        %v380 = vrot.slane %v272, 2
        %v381 = vrot.slane %v273, 2
        %v382 = vsel %vm349, %v380, %v381
        %v383 = vrot.slane %v274, 2
        %v384 = vsel %vm349, %v381, %v383
        %v385 = vrot.slane %v275, 2
        %v386 = vrot.slane %v276, 2
        %v387 = vsel %vm349, %v385, %v386
        %v388 = vrot.slane %v277, 2
        %v389 = vsel %vm349, %v386, %v388
        %v393 = vrot.slane %v278, 1
        %v394 = vrot.slane %v279, 1
        %v395 = vsel %vm308, %v393, %v394
        %v396 = vrot.slane %v280, 1
        %v397 = vsel %vm308, %v394, %v396
        %v398 = vrot.slane %v278, 2
        %v399 = vrot.slane %v279, 2
        %v400 = vsel %vm349, %v398, %v399
        %v401 = vrot.slane %v280, 2
        %v402 = vsel %vm349, %v399, %v401
        %v406 = vrot.slane %v281, 1
        %v407 = vrot.slane %v282, 1
        %v408 = vsel %vm308, %v406, %v407
        %v409 = vrot.slane %v283, 1
        %v410 = vsel %vm308, %v407, %v409
        %v411 = vrot.slane %v281, 2
        %v412 = vrot.slane %v282, 2
        %v413 = vsel %vm349, %v411, %v412
        %v414 = vrot.slane %v283, 2
        %v415 = vsel %vm349, %v412, %v414
        %416 = vrot.lane.b32.xlu0 %v311, 4
        %v417 = vpop.permute.xlu0 %416
        %418 = vrot.lane.b32.xlu0 %v313, 4
        %v419 = vpop.permute.xlu0 %418
        %420 = vrot.lane.b32.xlu0 %v316, 4
        %v421 = vpop.permute.xlu0 %420
        %422 = vrot.lane.b32.xlu0 %v318, 4
        %v423 = vpop.permute.xlu0 %422
        %424 = vrot.lane.b32.xlu0 %v321, 4
        %v425 = vpop.permute.xlu0 %424
        %426 = vrot.lane.b32.xlu0 %v323, 4
        %v427 = vpop.permute.xlu0 %426
        %428 = vrot.lane.b32.xlu0 %v326, 4
        %v429 = vpop.permute.xlu0 %428
        %430 = vrot.lane.b32.xlu0 %v328, 4
        %v431 = vpop.permute.xlu0 %430
        %432 = vrot.lane.b32.xlu0 %v331, 4
        %v433 = vpop.permute.xlu0 %432
        %434 = vrot.lane.b32.xlu0 %v333, 4
        %v435 = vpop.permute.xlu0 %434
        %436 = vrot.lane.b32.xlu0 %v336, 4
        %v437 = vpop.permute.xlu0 %436
        %438 = vrot.lane.b32.xlu0 %v338, 4
        %v439 = vpop.permute.xlu0 %438
        %440 = vrot.lane.b32.xlu0 %v341, 4
        %v441 = vpop.permute.xlu0 %440
        %442 = vrot.lane.b32.xlu0 %v343, 4
        %v443 = vpop.permute.xlu0 %442
        %444 = vrot.lane.b32.xlu0 %v346, 4
        %v445 = vpop.permute.xlu0 %444
        %446 = vrot.lane.b32.xlu0 %v348, 4
        %v447 = vpop.permute.xlu0 %446
        %464 = vrot.lane.b32.xlu0 %v352, 8
        %v465 = vpop.permute.xlu0 %464
        %466 = vrot.lane.b32.xlu0 %v354, 8
        %v467 = vpop.permute.xlu0 %466
        %468 = vrot.lane.b32.xlu0 %v357, 8
        %v469 = vpop.permute.xlu0 %468
        %470 = vrot.lane.b32.xlu0 %v359, 8
        %v471 = vpop.permute.xlu0 %470
        %472 = vrot.lane.b32.xlu0 %v362, 8
        %v473 = vpop.permute.xlu0 %472
        %474 = vrot.lane.b32.xlu0 %v364, 8
        %v475 = vpop.permute.xlu0 %474
        %476 = vrot.lane.b32.xlu0 %v367, 8
        %v477 = vpop.permute.xlu0 %476
        %478 = vrot.lane.b32.xlu0 %v369, 8
        %v479 = vpop.permute.xlu0 %478
        %480 = vrot.lane.b32.xlu0 %v372, 8
        %v481 = vpop.permute.xlu0 %480
        %482 = vrot.lane.b32.xlu0 %v374, 8
        %v483 = vpop.permute.xlu0 %482
        %484 = vrot.lane.b32.xlu0 %v377, 8
        %v485 = vpop.permute.xlu0 %484
        %486 = vrot.lane.b32.xlu0 %v379, 8
        %v487 = vpop.permute.xlu0 %486
        %488 = vrot.lane.b32.xlu0 %v382, 8
        %v489 = vpop.permute.xlu0 %488
        %490 = vrot.lane.b32.xlu0 %v384, 8
        %v491 = vpop.permute.xlu0 %490
        %492 = vrot.lane.b32.xlu0 %v387, 8
        %v493 = vpop.permute.xlu0 %492
        %494 = vrot.lane.b32.xlu0 %v389, 8
        %v495 = vpop.permute.xlu0 %494
        %512 = vrot.lane.b32.xlu0 %v257, 12
        %v513 = vpop.permute.xlu0 %512
        %514 = vrot.lane.b32.xlu0 %v258, 12
        %v515 = vpop.permute.xlu0 %514
        %516 = vrot.lane.b32.xlu0 %v260, 12
        %v517 = vpop.permute.xlu0 %516
        %518 = vrot.lane.b32.xlu0 %v261, 12
        %v519 = vpop.permute.xlu0 %518
        %520 = vrot.lane.b32.xlu0 %v263, 12
        %v521 = vpop.permute.xlu0 %520
        %522 = vrot.lane.b32.xlu0 %v264, 12
        %v523 = vpop.permute.xlu0 %522
        %524 = vrot.lane.b32.xlu0 %v266, 12
        %v525 = vpop.permute.xlu0 %524
        %526 = vrot.lane.b32.xlu0 %v267, 12
        %v527 = vpop.permute.xlu0 %526
        %528 = vrot.lane.b32.xlu0 %v269, 12
        %v529 = vpop.permute.xlu0 %528
        %530 = vrot.lane.b32.xlu0 %v270, 12
        %v531 = vpop.permute.xlu0 %530
        %532 = vrot.lane.b32.xlu0 %v272, 12
        %v533 = vpop.permute.xlu0 %532
        %534 = vrot.lane.b32.xlu0 %v273, 12
        %v535 = vpop.permute.xlu0 %534
        %536 = vrot.lane.b32.xlu0 %v275, 12
        %v537 = vpop.permute.xlu0 %536
        %538 = vrot.lane.b32.xlu0 %v276, 12
        %v539 = vpop.permute.xlu0 %538
        %540 = vrot.lane.b32.xlu0 %v278, 12
        %v541 = vpop.permute.xlu0 %540
        %542 = vrot.lane.b32.xlu0 %v279, 12
        %v543 = vpop.permute.xlu0 %542
        %560 = vrot.lane.b32.xlu0 %v316, 16
        %v561 = vpop.permute.xlu0 %560
        %562 = vrot.lane.b32.xlu0 %v318, 16
        %v563 = vpop.permute.xlu0 %562
        %564 = vrot.lane.b32.xlu0 %v321, 16
        %v565 = vpop.permute.xlu0 %564
        %566 = vrot.lane.b32.xlu0 %v323, 16
        %v567 = vpop.permute.xlu0 %566
        %568 = vrot.lane.b32.xlu0 %v326, 16
        %v569 = vpop.permute.xlu0 %568
        %570 = vrot.lane.b32.xlu0 %v328, 16
        %v571 = vpop.permute.xlu0 %570
        %572 = vrot.lane.b32.xlu0 %v331, 16
        %v573 = vpop.permute.xlu0 %572
        %574 = vrot.lane.b32.xlu0 %v333, 16
        %v575 = vpop.permute.xlu0 %574
        %576 = vrot.lane.b32.xlu0 %v336, 16
        %v577 = vpop.permute.xlu0 %576
        %578 = vrot.lane.b32.xlu0 %v338, 16
        %v579 = vpop.permute.xlu0 %578
        %580 = vrot.lane.b32.xlu0 %v341, 16
        %v581 = vpop.permute.xlu0 %580
        %582 = vrot.lane.b32.xlu0 %v343, 16
        %v583 = vpop.permute.xlu0 %582
        %584 = vrot.lane.b32.xlu0 %v346, 16
        %v585 = vpop.permute.xlu0 %584
        %586 = vrot.lane.b32.xlu0 %v348, 16
        %v587 = vpop.permute.xlu0 %586
        %588 = vrot.lane.b32.xlu0 %v395, 16
        %v589 = vpop.permute.xlu0 %588
        %590 = vrot.lane.b32.xlu0 %v397, 16
        %v591 = vpop.permute.xlu0 %590
        %608 = vrot.lane.b32.xlu0 %v357, 20
        %v609 = vpop.permute.xlu0 %608
        %610 = vrot.lane.b32.xlu0 %v359, 20
        %v611 = vpop.permute.xlu0 %610
        %612 = vrot.lane.b32.xlu0 %v362, 20
        %v613 = vpop.permute.xlu0 %612
        %614 = vrot.lane.b32.xlu0 %v364, 20
        %v615 = vpop.permute.xlu0 %614
        %616 = vrot.lane.b32.xlu0 %v367, 20
        %v617 = vpop.permute.xlu0 %616
        %618 = vrot.lane.b32.xlu0 %v369, 20
        %v619 = vpop.permute.xlu0 %618
        %620 = vrot.lane.b32.xlu0 %v372, 20
        %v621 = vpop.permute.xlu0 %620
        %622 = vrot.lane.b32.xlu0 %v374, 20
        %v623 = vpop.permute.xlu0 %622
        %624 = vrot.lane.b32.xlu0 %v377, 20
        %v625 = vpop.permute.xlu0 %624
        %626 = vrot.lane.b32.xlu0 %v379, 20
        %v627 = vpop.permute.xlu0 %626
        %628 = vrot.lane.b32.xlu0 %v382, 20
        %v629 = vpop.permute.xlu0 %628
        %630 = vrot.lane.b32.xlu0 %v384, 20
        %v631 = vpop.permute.xlu0 %630
        %632 = vrot.lane.b32.xlu0 %v387, 20
        %v633 = vpop.permute.xlu0 %632
        %634 = vrot.lane.b32.xlu0 %v389, 20
        %v635 = vpop.permute.xlu0 %634
        %636 = vrot.lane.b32.xlu0 %v400, 20
        %v637 = vpop.permute.xlu0 %636
        %638 = vrot.lane.b32.xlu0 %v402, 20
        %v639 = vpop.permute.xlu0 %638
        %656 = vrot.lane.b32.xlu0 %v260, 24
        %v657 = vpop.permute.xlu0 %656
        %658 = vrot.lane.b32.xlu0 %v261, 24
        %v659 = vpop.permute.xlu0 %658
        %660 = vrot.lane.b32.xlu0 %v263, 24
        %v661 = vpop.permute.xlu0 %660
        %662 = vrot.lane.b32.xlu0 %v264, 24
        %v663 = vpop.permute.xlu0 %662
        %664 = vrot.lane.b32.xlu0 %v266, 24
        %v665 = vpop.permute.xlu0 %664
        %666 = vrot.lane.b32.xlu0 %v267, 24
        %v667 = vpop.permute.xlu0 %666
        %668 = vrot.lane.b32.xlu0 %v269, 24
        %v669 = vpop.permute.xlu0 %668
        %670 = vrot.lane.b32.xlu0 %v270, 24
        %v671 = vpop.permute.xlu0 %670
        %672 = vrot.lane.b32.xlu0 %v272, 24
        %v673 = vpop.permute.xlu0 %672
        %674 = vrot.lane.b32.xlu0 %v273, 24
        %v675 = vpop.permute.xlu0 %674
        %676 = vrot.lane.b32.xlu0 %v275, 24
        %v677 = vpop.permute.xlu0 %676
        %678 = vrot.lane.b32.xlu0 %v276, 24
        %v679 = vpop.permute.xlu0 %678
        %680 = vrot.lane.b32.xlu0 %v278, 24
        %v681 = vpop.permute.xlu0 %680
        %682 = vrot.lane.b32.xlu0 %v279, 24
        %v683 = vpop.permute.xlu0 %682
        %684 = vrot.lane.b32.xlu0 %v281, 24
        %v685 = vpop.permute.xlu0 %684
        %686 = vrot.lane.b32.xlu0 %v282, 24
        %v687 = vpop.permute.xlu0 %686
        %704 = vrot.lane.b32.xlu0 %v321, 28
        %v705 = vpop.permute.xlu0 %704
        %706 = vrot.lane.b32.xlu0 %v323, 28
        %v707 = vpop.permute.xlu0 %706
        %708 = vrot.lane.b32.xlu0 %v326, 28
        %v709 = vpop.permute.xlu0 %708
        %710 = vrot.lane.b32.xlu0 %v328, 28
        %v711 = vpop.permute.xlu0 %710
        %712 = vrot.lane.b32.xlu0 %v331, 28
        %v713 = vpop.permute.xlu0 %712
        %714 = vrot.lane.b32.xlu0 %v333, 28
        %v715 = vpop.permute.xlu0 %714
        %716 = vrot.lane.b32.xlu0 %v336, 28
        %v717 = vpop.permute.xlu0 %716
        %718 = vrot.lane.b32.xlu0 %v338, 28
        %v719 = vpop.permute.xlu0 %718
        %720 = vrot.lane.b32.xlu0 %v341, 28
        %v721 = vpop.permute.xlu0 %720
        %722 = vrot.lane.b32.xlu0 %v343, 28
        %v723 = vpop.permute.xlu0 %722
        %724 = vrot.lane.b32.xlu0 %v346, 28
        %v725 = vpop.permute.xlu0 %724
        %726 = vrot.lane.b32.xlu0 %v348, 28
        %v727 = vpop.permute.xlu0 %726
        %728 = vrot.lane.b32.xlu0 %v395, 28
        %v729 = vpop.permute.xlu0 %728
        %730 = vrot.lane.b32.xlu0 %v397, 28
        %v731 = vpop.permute.xlu0 %730
        %732 = vrot.lane.b32.xlu0 %v408, 28
        %v733 = vpop.permute.xlu0 %732
        %734 = vrot.lane.b32.xlu0 %v410, 28
        %v735 = vpop.permute.xlu0 %734
        %752 = vrot.lane.b32.xlu0 %v362, 32
        %v753 = vpop.permute.xlu0 %752
        %754 = vrot.lane.b32.xlu0 %v364, 32
        %v755 = vpop.permute.xlu0 %754
        %756 = vrot.lane.b32.xlu0 %v367, 32
        %v757 = vpop.permute.xlu0 %756
        %758 = vrot.lane.b32.xlu0 %v369, 32
        %v759 = vpop.permute.xlu0 %758
        %760 = vrot.lane.b32.xlu0 %v372, 32
        %v761 = vpop.permute.xlu0 %760
        %762 = vrot.lane.b32.xlu0 %v374, 32
        %v763 = vpop.permute.xlu0 %762
        %764 = vrot.lane.b32.xlu0 %v377, 32
        %v765 = vpop.permute.xlu0 %764
        %766 = vrot.lane.b32.xlu0 %v379, 32
        %v767 = vpop.permute.xlu0 %766
        %768 = vrot.lane.b32.xlu0 %v382, 32
        %v769 = vpop.permute.xlu0 %768
        %770 = vrot.lane.b32.xlu0 %v384, 32
        %v771 = vpop.permute.xlu0 %770
        %772 = vrot.lane.b32.xlu0 %v387, 32
        %v773 = vpop.permute.xlu0 %772
        %774 = vrot.lane.b32.xlu0 %v389, 32
        %v775 = vpop.permute.xlu0 %774
        %776 = vrot.lane.b32.xlu0 %v400, 32
        %v777 = vpop.permute.xlu0 %776
        %778 = vrot.lane.b32.xlu0 %v402, 32
        %v779 = vpop.permute.xlu0 %778
        %780 = vrot.lane.b32.xlu0 %v413, 32
        %v781 = vpop.permute.xlu0 %780
        %782 = vrot.lane.b32.xlu0 %v415, 32
        %v783 = vpop.permute.xlu0 %782
        %vm800 = vcmask 31744
        %v801 = vsel %vm800, %v254, %v417
        %v802 = vsel %vm800, %v255, %v419
        %v803 = vsel %vm800, %v257, %v421
        %v804 = vsel %vm800, %v258, %v423
        %v805 = vsel %vm800, %v260, %v425
        %v806 = vsel %vm800, %v261, %v427
        %v807 = vsel %vm800, %v263, %v429
        %v808 = vsel %vm800, %v264, %v431
        %v809 = vsel %vm800, %v266, %v433
        %v810 = vsel %vm800, %v267, %v435
        %v811 = vsel %vm800, %v269, %v437
        %v812 = vsel %vm800, %v270, %v439
        %v813 = vsel %vm800, %v272, %v441
        %v814 = vsel %vm800, %v273, %v443
        %v815 = vsel %vm800, %v275, %v445
        %v816 = vsel %vm800, %v276, %v447
        %vm817 = vcmask 64512
        %v818 = vsel %vm817, %v801, %v465
        %v819 = vsel %vm817, %v802, %v467
        %v820 = vsel %vm817, %v803, %v469
        %v821 = vsel %vm817, %v804, %v471
        %v822 = vsel %vm817, %v805, %v473
        %v823 = vsel %vm817, %v806, %v475
        %v824 = vsel %vm817, %v807, %v477
        %v825 = vsel %vm817, %v808, %v479
        %v826 = vsel %vm817, %v809, %v481
        %v827 = vsel %vm817, %v810, %v483
        %v828 = vsel %vm817, %v811, %v485
        %v829 = vsel %vm817, %v812, %v487
        %v830 = vsel %vm817, %v813, %v489
        %v831 = vsel %vm817, %v814, %v491
        %v832 = vsel %vm817, %v815, %v493
        %v833 = vsel %vm817, %v816, %v495
        %vm834 = vcmask 97280
        %v835 = vsel %vm834, %v818, %v513
        %v836 = vsel %vm834, %v819, %v515
        %v837 = vsel %vm834, %v820, %v517
        %v838 = vsel %vm834, %v821, %v519
        %v839 = vsel %vm834, %v822, %v521
        %v840 = vsel %vm834, %v823, %v523
        %v841 = vsel %vm834, %v824, %v525
        %v842 = vsel %vm834, %v825, %v527
        %v843 = vsel %vm834, %v826, %v529
        %v844 = vsel %vm834, %v827, %v531
        %v845 = vsel %vm834, %v828, %v533
        %v846 = vsel %vm834, %v829, %v535
        %v847 = vsel %vm834, %v830, %v537
        %v848 = vsel %vm834, %v831, %v539
        %v849 = vsel %vm834, %v832, %v541
        %v850 = vsel %vm834, %v833, %v543
        %vm851 = vcmask 130048
        %v852 = vsel %vm851, %v835, %v561
        %v853 = vsel %vm851, %v836, %v563
        %v854 = vsel %vm851, %v837, %v565
        %v855 = vsel %vm851, %v838, %v567
        %v856 = vsel %vm851, %v839, %v569
        %v857 = vsel %vm851, %v840, %v571
        %v858 = vsel %vm851, %v841, %v573
        %v859 = vsel %vm851, %v842, %v575
        %v860 = vsel %vm851, %v843, %v577
        %v861 = vsel %vm851, %v844, %v579
        %v862 = vsel %vm851, %v845, %v581
        %v863 = vsel %vm851, %v846, %v583
        %v864 = vsel %vm851, %v847, %v585
        %v865 = vsel %vm851, %v848, %v587
        %v866 = vsel %vm851, %v849, %v589
        %v867 = vsel %vm851, %v850, %v591
        %vm868 = vcmask 162816
        %v869 = vsel %vm868, %v852, %v609
        %v870 = vsel %vm868, %v853, %v611
        %v871 = vsel %vm868, %v854, %v613
        %v872 = vsel %vm868, %v855, %v615
        %v873 = vsel %vm868, %v856, %v617
        %v874 = vsel %vm868, %v857, %v619
        %v875 = vsel %vm868, %v858, %v621
        %v876 = vsel %vm868, %v859, %v623
        %v877 = vsel %vm868, %v860, %v625
        %v878 = vsel %vm868, %v861, %v627
        %v879 = vsel %vm868, %v862, %v629
        %v880 = vsel %vm868, %v863, %v631
        %v881 = vsel %vm868, %v864, %v633
        %v882 = vsel %vm868, %v865, %v635
        %v883 = vsel %vm868, %v866, %v637
        %v884 = vsel %vm868, %v867, %v639
        %vm885 = vcmask 195584
        %v886 = vsel %vm885, %v869, %v657
        %v887 = vsel %vm885, %v870, %v659
        %v888 = vsel %vm885, %v871, %v661
        %v889 = vsel %vm885, %v872, %v663
        %v890 = vsel %vm885, %v873, %v665
        %v891 = vsel %vm885, %v874, %v667
        %v892 = vsel %vm885, %v875, %v669
        %v893 = vsel %vm885, %v876, %v671
        %v894 = vsel %vm885, %v877, %v673
        %v895 = vsel %vm885, %v878, %v675
        %v896 = vsel %vm885, %v879, %v677
        %v897 = vsel %vm885, %v880, %v679
        %v898 = vsel %vm885, %v881, %v681
        %v899 = vsel %vm885, %v882, %v683
        %v900 = vsel %vm885, %v883, %v685
        %v901 = vsel %vm885, %v884, %v687
        %vm902 = vcmask 228352
        %v903 = vsel %vm902, %v886, %v705
        %v904 = vsel %vm902, %v887, %v707
        %v905 = vsel %vm902, %v888, %v709
        %v906 = vsel %vm902, %v889, %v711
        %v907 = vsel %vm902, %v890, %v713
        %v908 = vsel %vm902, %v891, %v715
        %v909 = vsel %vm902, %v892, %v717
        %v910 = vsel %vm902, %v893, %v719
        %v911 = vsel %vm902, %v894, %v721
        %v912 = vsel %vm902, %v895, %v723
        %v913 = vsel %vm902, %v896, %v725
        %v914 = vsel %vm902, %v897, %v727
        %v915 = vsel %vm902, %v898, %v729
        %v916 = vsel %vm902, %v899, %v731
        %v917 = vsel %vm902, %v900, %v733
        %v918 = vsel %vm902, %v901, %v735
        %vm919 = vcmask 261120
        %v920 = vsel %vm919, %v903, %v753
        %v921 = vsel %vm919, %v904, %v755
        %v922 = vsel %vm919, %v905, %v757
        %v923 = vsel %vm919, %v906, %v759
        %v924 = vsel %vm919, %v907, %v761
        %v925 = vsel %vm919, %v908, %v763
        %v926 = vsel %vm919, %v909, %v765
        %v927 = vsel %vm919, %v910, %v767
        %v928 = vsel %vm919, %v911, %v769
        %v929 = vsel %vm919, %v912, %v771
        %v930 = vsel %vm919, %v913, %v773
        %v931 = vsel %vm919, %v914, %v775
        %v932 = vsel %vm919, %v915, %v777
        %v933 = vsel %vm919, %v916, %v779
        %v934 = vsel %vm919, %v917, %v781
        %v935 = vsel %vm919, %v918, %v783
        %v936 = vld [vmem:[%s1] sm:$0xff]
        %v937 = vld [vmem:[%s1 + $0x8] sm:$0xff]
        %v938 = vld [vmem:[%s1 + $0x10] sm:$0xff]
        %v939 = vld [vmem:[%s1 + $0x18] sm:$0xff]
        %v940 = vld [vmem:[%s1 + $0x20] sm:$0xf]
        %v941 = vld [vmem:[%s2] sm:$0x1]
        %v943 = vlaneseq
        %v944 = vshrl.u32 %v943, 7
        %v945 = vsub.s32 0, %v944
        %v946 = vrot.slane %v941, %v945
        %vm948 = vcmask 293888
        %v950 = vsel %vm948, %v920, 0
        %v953 = vsel %vm948, %v921, 0
        %v956 = vsel %vm948, %v922, 0
        %v959 = vsel %vm948, %v923, 0
        %v962 = vsel %vm948, %v924, 0
        %v965 = vsel %vm948, %v925, 0
        %v968 = vsel %vm948, %v926, 0
        %v971 = vsel %vm948, %v927, 0
        %v974 = vsel %vm948, %v928, 0
        %v977 = vsel %vm948, %v929, 0
        %v980 = vsel %vm948, %v930, 0
        %v983 = vsel %vm948, %v931, 0
        %v986 = vsel %vm948, %v932, 0
        %v989 = vsel %vm948, %v933, 0
        %v992 = vsel %vm948, %v934, 0
        %v995 = vsel %vm948, %v935, 0
        %vm997 = vcmask 1043456
        %v999 = vsel %vm997, %v940, 0
        %1001 = vmatprep.subr.mxu0 0.0
        %1002 = vmatpush1.msra.mxu0 %v936
        %1003 = vmatprep.subr.mxu0 0.0
        %1004 = vmatpush1.msra.mxu0 %v937
        %1005 = vmatprep.subr.mxu0 0.0
        %1006 = vmatpush1.msra.mxu0 %v938
        %1007 = vmatprep.subr.mxu0 0.0
        %1008 = vmatpush1.msra.mxu0 %v939
        %1009 = vmatprep.subr.mxu0 0.0
        %1010 = vmatpush1.msra.mxu0 %v999
        %1011 = vmatprep.subr.mxu0 0.0
        %1012 = vmatpush1.msra.mxu0 0.0
        %1013 = vmatprep.subr.mxu0 0.0
        %1014 = vmatpush1.msra.mxu0 0.0
        %1015 = vmatprep.subr.mxu0 0.0
        %1016 = vmatpush1.msra.mxu0 0.0
        %1017 = vmatprep.subr.mxu0 0.0
        %1018 = vmatpush1.msra.mxu0 0.0
        %1019 = vmatprep.subr.mxu0 0.0
        %1020 = vmatpush1.msra.mxu0 0.0
        %1021 = vmatprep.subr.mxu0 0.0
        %1022 = vmatpush1.msra.mxu0 0.0
        %1023 = vmatprep.subr.mxu0 0.0
        %1024 = vmatpush1.msra.mxu0 0.0
        %1025 = vmatprep.subr.mxu0 0.0
        %1026 = vmatpush1.msra.mxu0 0.0
        %1027 = vmatprep.subr.mxu0 0.0
        %1028 = vmatpush1.msra.mxu0 0.0
        %1029 = vmatprep.subr.mxu0 0.0
        %1030 = vmatpush1.msra.mxu0 0.0
        %1031 = vmatprep.subr.mxu0 0.0
        %1032 = vmatpush1.msra.mxu0 0.0
        %1033 = vmatprep.subr.mxu0 0.0
        %1034 = vmatpush1.msra.mxu0 0.0
        %1035 = vmatprep.subr.mxu0 0.0
        %1036 = vmatpush1.msra.mxu0 0.0
        %1037 = vmatprep.subr.mxu0 0.0
        %1038 = vmatpush1.msra.mxu0 0.0
        %1039 = vmatprep.subr.mxu0 0.0
        %1040 = vmatpush1.msra.mxu0 0.0
        %1041 = vmatprep.subr.mxu0 0.0
        %1042 = vmatpush1.msra.mxu0 0.0
        %1043 = vmatprep.subr.mxu0 0.0
        %1044 = vmatpush1.msra.mxu0 0.0
        %1045 = vmatprep.subr.mxu0 0.0
        %1046 = vmatpush1.msra.mxu0 0.0
        %1047 = vmatprep.subr.mxu0 0.0
        %1048 = vmatpush1.msra.mxu0 0.0
        %1049 = vmatprep.subr.mxu0 0.0
        %1050 = vmatpush1.msra.mxu0 0.0
        %1051 = vmatprep.subr.mxu0 0.0
        %1052 = vmatpush1.msra.mxu0 0.0
        %1053 = vmatprep.subr.mxu0 0.0
        %1054 = vmatpush1.msra.mxu0 0.0
        %1055 = vmatprep.subr.mxu0 0.0
        %1056 = vmatpush1.msra.mxu0 0.0
        %1057 = vmatprep.subr.mxu0 0.0
        %1058 = vmatpush1.msra.mxu0 0.0
        %1059 = vmatprep.subr.mxu0 0.0
        %1060 = vmatpush1.msra.mxu0 0.0
        %1061 = vmatprep.subr.mxu0 0.0
        %1062 = vmatpush1.msra.mxu0 0.0
        %1063 = vmatprep.subr.mxu0 0.0
        %1064 = vmatpush1.msra.mxu0 0.0
        %1065 = vmatprep.mubr.f32.mxu0 0.0
        %1066 = vmatmul.mubr.f32.gmra.mrb[0].mxu0 %v950
        %v1067 = vpop.f32.mrb[0].mxu0
        %v1068 = vadd.f32 %v946, %v1067
        %v1069 = vpop.f32.mrb[0].mxu0
        %1070 = vmatprep.mubr.f32.mxu0 0.0
        %1071 = vmatmul.mubr.f32.gmra.mrb[0].mxu0 %v953
        %v1072 = vpop.f32.mrb[0].mxu0
        %v1073 = vadd.f32 %v946, %v1072
        %v1074 = vpop.f32.mrb[0].mxu0
        %1075 = vmatprep.mubr.f32.mxu0 0.0
        %1076 = vmatmul.mubr.f32.gmra.mrb[0].mxu0 %v956
        %v1077 = vpop.f32.mrb[0].mxu0
        %v1078 = vadd.f32 %v946, %v1077
        %v1079 = vpop.f32.mrb[0].mxu0
        %1080 = vmatprep.mubr.f32.mxu0 0.0
        %1081 = vmatmul.mubr.f32.gmra.mrb[0].mxu0 %v959
        %v1082 = vpop.f32.mrb[0].mxu0
        %v1083 = vadd.f32 %v946, %v1082
        %v1084 = vpop.f32.mrb[0].mxu0
        %1085 = vmatprep.mubr.f32.mxu0 0.0
        %1086 = vmatmul.mubr.f32.gmra.mrb[0].mxu0 %v962
        %v1087 = vpop.f32.mrb[0].mxu0
        %v1088 = vadd.f32 %v946, %v1087
        %v1089 = vpop.f32.mrb[0].mxu0
        %1090 = vmatprep.mubr.f32.mxu0 0.0
        %1091 = vmatmul.mubr.f32.gmra.mrb[0].mxu0 %v965
        %v1092 = vpop.f32.mrb[0].mxu0
        %v1093 = vadd.f32 %v946, %v1092
        %v1094 = vpop.f32.mrb[0].mxu0
        %1095 = vmatprep.mubr.f32.mxu0 0.0
        %1096 = vmatmul.mubr.f32.gmra.mrb[0].mxu0 %v968
        %v1097 = vpop.f32.mrb[0].mxu0
        %v1098 = vadd.f32 %v946, %v1097
        %v1099 = vpop.f32.mrb[0].mxu0
        %1100 = vmatprep.mubr.f32.mxu0 0.0
        %1101 = vmatmul.mubr.f32.gmra.mrb[0].mxu0 %v971
        %v1102 = vpop.f32.mrb[0].mxu0
        %v1103 = vadd.f32 %v946, %v1102
        %v1104 = vpop.f32.mrb[0].mxu0
        %1105 = vmatprep.mubr.f32.mxu0 0.0
        %1106 = vmatmul.mubr.f32.gmra.mrb[0].mxu0 %v974
        %v1107 = vpop.f32.mrb[0].mxu0
        %v1108 = vadd.f32 %v946, %v1107
        %v1109 = vpop.f32.mrb[0].mxu0
        %1110 = vmatprep.mubr.f32.mxu0 0.0
        %1111 = vmatmul.mubr.f32.gmra.mrb[0].mxu0 %v977
        %v1112 = vpop.f32.mrb[0].mxu0
        %v1113 = vadd.f32 %v946, %v1112
        %v1114 = vpop.f32.mrb[0].mxu0
        %1115 = vmatprep.mubr.f32.mxu0 0.0
        %1116 = vmatmul.mubr.f32.gmra.mrb[0].mxu0 %v980
        %v1117 = vpop.f32.mrb[0].mxu0
        %v1118 = vadd.f32 %v946, %v1117
        %v1119 = vpop.f32.mrb[0].mxu0
        %1120 = vmatprep.mubr.f32.mxu0 0.0
        %1121 = vmatmul.mubr.f32.gmra.mrb[0].mxu0 %v983
        %v1122 = vpop.f32.mrb[0].mxu0
        %v1123 = vadd.f32 %v946, %v1122
        %v1124 = vpop.f32.mrb[0].mxu0
        %1125 = vmatprep.mubr.f32.mxu0 0.0
        %1126 = vmatmul.mubr.f32.gmra.mrb[0].mxu0 %v986
        %v1127 = vpop.f32.mrb[0].mxu0
        %v1128 = vadd.f32 %v946, %v1127
        %v1129 = vpop.f32.mrb[0].mxu0
        %1130 = vmatprep.mubr.f32.mxu0 0.0
        %1131 = vmatmul.mubr.f32.gmra.mrb[0].mxu0 %v989
        %v1132 = vpop.f32.mrb[0].mxu0
        %v1133 = vadd.f32 %v946, %v1132
        %v1134 = vpop.f32.mrb[0].mxu0
        %1135 = vmatprep.mubr.f32.mxu0 0.0
        %1136 = vmatmul.mubr.f32.gmra.mrb[0].mxu0 %v992
        %v1137 = vpop.f32.mrb[0].mxu0
        %v1138 = vadd.f32 %v946, %v1137
        %v1139 = vpop.f32.mrb[0].mxu0
        %1140 = vmatprep.mubr.f32.mxu0 0.0
        %1141 = vmatmul.mubr.f32.gmra.mrb[0].mxu0 %v995
        %v1142 = vpop.f32.mrb[0].mxu0
        %v1143 = vadd.f32 %v946, %v1142
        %v1144 = vpop.f32.mrb[0].mxu0
        %1145 = vdwg.mxu0
        %v1146 = vmax.f32 %v1068, 0.0
        %v1147 = vmax.f32 %v1073, 0.0
        %v1148 = vmax.f32 %v1078, 0.0
        %v1149 = vmax.f32 %v1083, 0.0
        %v1150 = vmax.f32 %v1088, 0.0
        %v1151 = vmax.f32 %v1093, 0.0
        %v1152 = vmax.f32 %v1098, 0.0
        %v1153 = vmax.f32 %v1103, 0.0
        %v1154 = vmax.f32 %v1108, 0.0
        %v1155 = vmax.f32 %v1113, 0.0
        %v1156 = vmax.f32 %v1118, 0.0
        %v1157 = vmax.f32 %v1123, 0.0
        %v1158 = vmax.f32 %v1128, 0.0
        %v1159 = vmax.f32 %v1133, 0.0
        %v1160 = vmax.f32 %v1138, 0.0
        %v1161 = vmax.f32 %v1143, 0.0
        %v1162 = vld [vmem:[#allocation2] sm:$0x1]
        %1163 = vmatprep.subr.mxu0 0.0
        %1164 = vmatpush1.msra.mxu0 %v1146
        %1165 = vmatprep.subr.mxu0 0.0
        %1166 = vmatpush1.msra.mxu0 %v1147
        %1167 = vmatprep.subr.mxu0 0.0
        %1168 = vmatpush1.msra.mxu0 %v1148
        %1169 = vmatprep.subr.mxu0 0.0
        %1170 = vmatpush1.msra.mxu0 %v1149
        %1171 = vmatprep.subr.mxu0 0.0
        %1172 = vmatpush1.msra.mxu0 %v1150
        %1173 = vmatprep.subr.mxu0 0.0
        %1174 = vmatpush1.msra.mxu0 %v1151
        %1175 = vmatprep.subr.mxu0 0.0
        %1176 = vmatpush1.msra.mxu0 %v1152
        %1177 = vmatprep.subr.mxu0 0.0
        %1178 = vmatpush1.msra.mxu0 %v1153
        %1179 = vmatprep.subr.mxu0 0.0
        %1180 = vmatpush1.msra.mxu0 %v1154
        %1181 = vmatprep.subr.mxu0 0.0
        %1182 = vmatpush1.msra.mxu0 %v1155
        %1183 = vmatprep.subr.mxu0 0.0
        %1184 = vmatpush1.msra.mxu0 %v1156
        %1185 = vmatprep.subr.mxu0 0.0
        %1186 = vmatpush1.msra.mxu0 %v1157
        %1187 = vmatprep.subr.mxu0 0.0
        %1188 = vmatpush1.msra.mxu0 %v1158
        %1189 = vmatprep.subr.mxu0 0.0
        %1190 = vmatpush1.msra.mxu0 %v1159
        %1191 = vmatprep.subr.mxu0 0.0
        %1192 = vmatpush1.msra.mxu0 %v1160
        %1193 = vmatprep.subr.mxu0 0.0
        %1194 = vmatpush1.msra.mxu0 %v1161
        %1195 = vmatprep.subr.mxu0 0.0
        %1196 = vmatpush1.msra.mxu0 0.0
        %1197 = vmatprep.subr.mxu0 0.0
        %1198 = vmatpush1.msra.mxu0 0.0
        %1199 = vmatprep.subr.mxu0 0.0
        %1200 = vmatpush1.msra.mxu0 0.0
        %1201 = vmatprep.subr.mxu0 0.0
        %1202 = vmatpush1.msra.mxu0 0.0
        %1203 = vmatprep.subr.mxu0 0.0
        %1204 = vmatpush1.msra.mxu0 0.0
        %1205 = vmatprep.subr.mxu0 0.0
        %1206 = vmatpush1.msra.mxu0 0.0
        %1207 = vmatprep.subr.mxu0 0.0
        %1208 = vmatpush1.msra.mxu0 0.0
        %1209 = vmatprep.subr.mxu0 0.0
        %1210 = vmatpush1.msra.mxu0 0.0
        %1211 = vmatprep.subr.mxu0 0.0
        %1212 = vmatpush1.msra.mxu0 0.0
        %1213 = vmatprep.subr.mxu0 0.0
        %1214 = vmatpush1.msra.mxu0 0.0
        %1215 = vmatprep.subr.mxu0 0.0
        %1216 = vmatpush1.msra.mxu0 0.0
        %1217 = vmatprep.subr.mxu0 0.0
        %1218 = vmatpush1.msra.mxu0 0.0
        %1219 = vmatprep.subr.mxu0 0.0
        %1220 = vmatpush1.msra.mxu0 0.0
        %1221 = vmatprep.subr.mxu0 0.0
        %1222 = vmatpush1.msra.mxu0 0.0
        %1223 = vmatprep.subr.mxu0 0.0
        %1224 = vmatpush1.msra.mxu0 0.0
        %1225 = vmatprep.subr.mxu0 0.0
        %1226 = vmatpush1.msra.mxu0 0.0
        %1227 = vmatprep.mubr.f32.mxu0 0.0
        %1228 = vmatmul.mubr.f32.gmra.mrb[0].mxu0 1.0
        %v1229 = vpop.f32.mrb[0].mxu0
        %v1230 = vadd.f32 0.0, %v1229
        %v1231 = vpop.f32.mrb[0].mxu0
        %1232 = vdwg.mxu0
        %v1233 = vadd.f32 %v1162, %v1230
        %1234 = vst [vmem:[#allocation2] sm:$0x1] %v1233
        %p1235 = scmp.eq.s32.totalorder %s24, 1
        // Predicated region
        $region45: #{tpu_custom_call.1} parent=39 // pred_check
          %p1236 = pneg %p1235
        $region46: #{tpu_custom_call.1} parent=39 // pred_check_branch
          %1238 = sbr.rel (%p1236) target = $region48
        $region47: #{tpu_custom_call.1} parent=39 // pred_region
          %v1239 = vld [vmem:[#allocation2] sm:$0x1]
          %v1240 = vmul.f32 %v1239, 0.00390625
          %v1241 = vld [vmem:[%s3] sm:$0xff]
          %v1242 = vld [vmem:[%s3 + $0x8] sm:$0xff]
          %v1243 = vld [vmem:[%s3 + $0x10] sm:$0xff]
          %v1244 = vld [vmem:[%s3 + $0x18] sm:$0xff]
          %v1245 = vld [vmem:[%s3 + $0x20] sm:$0xff]
          %v1246 = vld [vmem:[%s3 + $0x28] sm:$0xff]
          %v1247 = vld [vmem:[%s3 + $0x30] sm:$0xff]
          %v1248 = vld [vmem:[%s3 + $0x38] sm:$0xff]
          %v1249 = vld [vmem:[%s3 + $0x40] sm:$0xff]
          %v1250 = vld [vmem:[%s3 + $0x48] sm:$0xff]
          %v1251 = vld [vmem:[%s3 + $0x50] sm:$0xff]
          %v1252 = vld [vmem:[%s3 + $0x58] sm:$0xff]
          %v1253 = vld [vmem:[%s3 + $0x60] sm:$0xff]
          %v1254 = vld [vmem:[%s3 + $0x68] sm:$0xff]
          %v1255 = vld [vmem:[%s3 + $0x70] sm:$0xff]
          %v1256 = vld [vmem:[%s3 + $0x78] sm:$0xff]
          %v1257 = vld [vmem:[%s4] sm:$0x1]
          %1258 = vmatprep.subr.mxu0 0.0
          %1259 = vmatpush1.msra.mxu0 %v1241
          %1260 = vmatprep.subr.mxu0 0.0
          %1261 = vmatpush1.msra.mxu0 %v1242
          %1262 = vmatprep.subr.mxu0 0.0
          %1263 = vmatpush1.msra.mxu0 %v1243
          %1264 = vmatprep.subr.mxu0 0.0
          %1265 = vmatpush1.msra.mxu0 %v1244
          %1266 = vmatprep.subr.mxu0 0.0
          %1267 = vmatpush1.msra.mxu0 %v1245
          %1268 = vmatprep.subr.mxu0 0.0
          %1269 = vmatpush1.msra.mxu0 %v1246
          %1270 = vmatprep.subr.mxu0 0.0
          %1271 = vmatpush1.msra.mxu0 %v1247
          %1272 = vmatprep.subr.mxu0 0.0
          %1273 = vmatpush1.msra.mxu0 %v1248
          %1274 = vmatprep.subr.mxu0 0.0
          %1275 = vmatpush1.msra.mxu0 %v1249
          %1276 = vmatprep.subr.mxu0 0.0
          %1277 = vmatpush1.msra.mxu0 %v1250
          %1278 = vmatprep.subr.mxu0 0.0
          %1279 = vmatpush1.msra.mxu0 %v1251
          %1280 = vmatprep.subr.mxu0 0.0
          %1281 = vmatpush1.msra.mxu0 %v1252
          %1282 = vmatprep.subr.mxu0 0.0
          %1283 = vmatpush1.msra.mxu0 %v1253
          %1284 = vmatprep.subr.mxu0 0.0
          %1285 = vmatpush1.msra.mxu0 %v1254
          %1286 = vmatprep.subr.mxu0 0.0
          %1287 = vmatpush1.msra.mxu0 %v1255
          %1288 = vmatprep.subr.mxu0 0.0
          %1289 = vmatpush1.msra.mxu0 %v1256
          %1290 = vmatprep.subr.mxu0 0.0
          %1291 = vmatpush1.msra.mxu0 0.0
          %1292 = vmatprep.subr.mxu0 0.0
          %1293 = vmatpush1.msra.mxu0 0.0
          %1294 = vmatprep.subr.mxu0 0.0
          %1295 = vmatpush1.msra.mxu0 0.0
          %1296 = vmatprep.subr.mxu0 0.0
          %1297 = vmatpush1.msra.mxu0 0.0
          %1298 = vmatprep.subr.mxu0 0.0
          %1299 = vmatpush1.msra.mxu0 0.0
          %1300 = vmatprep.subr.mxu0 0.0
          %1301 = vmatpush1.msra.mxu0 0.0
          %1302 = vmatprep.subr.mxu0 0.0
          %1303 = vmatpush1.msra.mxu0 0.0
          %1304 = vmatprep.subr.mxu0 0.0
          %1305 = vmatpush1.msra.mxu0 0.0
          %1306 = vmatprep.subr.mxu0 0.0
          %1307 = vmatpush1.msra.mxu0 0.0
          %1308 = vmatprep.subr.mxu0 0.0
          %1309 = vmatpush1.msra.mxu0 0.0
          %1310 = vmatprep.subr.mxu0 0.0
          %1311 = vmatpush1.msra.mxu0 0.0
          %1312 = vmatprep.subr.mxu0 0.0
          %1313 = vmatpush1.msra.mxu0 0.0
          %1314 = vmatprep.subr.mxu0 0.0
          %1315 = vmatpush1.msra.mxu0 0.0
          %1316 = vmatprep.subr.mxu0 0.0
          %1317 = vmatpush1.msra.mxu0 0.0
          %1318 = vmatprep.subr.mxu0 0.0
          %1319 = vmatpush1.msra.mxu0 0.0
          %1320 = vmatprep.subr.mxu0 0.0
          %1321 = vmatpush1.msra.mxu0 0.0
          %1322 = vmatprep.mubr.f32.mxu0 0.0
          %1323 = vmatmul.mubr.f32.gmra.mrb[0].mxu0 %v1240
          %v1324 = vpop.f32.mrb[0].mxu0
          %v1325 = vadd.f32 %v1257, %v1324
          %v1326 = vpop.f32.mrb[0].mxu0
          %1327 = vdwg.mxu0
          %v1328 = vlaneseq
          %v1329 = vshrl.u32 %v1328, 7
          %v1330 = vsub.s32 0, %v1329
          %v1331 = vrot.slane %v1325, %v1330
          %1332 = vst [vmem:[%s239] sm:$0xff] %v1331
        $region48: #{tpu_custom_call.1} parent=39 // pred_fallthru
          _
        %s1333 = sand.u32 %s151, 1
        %s1334 = scalar_lea.sflag [#allocation4], %s1333
        %s1335 = sand.u32 %s151, 1
        %s1336 = smul.addr %s1335, 8
        %s1337 = scalar_lea.vmem [#allocation3], %s1336
        // Predicated region
        $region49: #{tpu_custom_call.1} parent=39 // pred_check
          %p1338 = pneg %p161
        $region50: #{tpu_custom_call.1} parent=39 // pred_check_branch
          %1340 = sbr.rel (%p1338) target = $region52
        $region51: #{tpu_custom_call.1} parent=39 // pred_region
          %s1342 = ssub.s32 128, 128
          %1343 = vsyncadd %s1334, %s1342
          %s1344 = smul.addr %s23, 128
          %s1345 = scalar_lea.hbm %s5, %s1344
          %s1347 = sshll.u32 %s1337, 4
          %s1348 = int_to_ptr.vmem [resolvable:$true] %s1347
          %1350 = dma.vmem_to_hbm [thread:$0]  %s1348, 128, %s1345, %s1334
        $region52: #{tpu_custom_call.1} parent=39 // pred_fallthru
          _
      $region40: #{tpu_custom_call.1} parent=5 // pred_fallthru
        _
      %p1351 = scmp.le.s32.totalorder 2, %s14
      // Predicated region
      $region53: #{tpu_custom_call.1} parent=5 // pred_check
        %p1352 = pneg %p1351
      $region54: #{tpu_custom_call.1} parent=5 // pred_check_branch
        %1354 = sbr.rel (%p1352) target = $region56
      $region55: #{tpu_custom_call.1} parent=5 // pred_region
        %s1355 = ssub.s32 %s14, 2
        // Predicated region
        $region57: #{tpu_custom_call.1} parent=55 // pred_check
          %p1356 = pneg %p167
        $region58: #{tpu_custom_call.1} parent=55 // pred_check_branch
          %1358 = sbr.rel (%p1356) target = $region60
        $region59: #{tpu_custom_call.1} parent=55 // pred_region
          %s1359 = sand.u32 %s152, 1
          %s1360 = scalar_lea.sflag [#allocation4], %s1359
          %s1361 = sand.u32 %s152, 1
          %s1362 = smul.addr %s1361, 8
          %s1363 = scalar_lea.vmem [#allocation3], %s1362
          %1364 = dma.done %s1360, 128
        $region60: #{tpu_custom_call.1} parent=55 // pred_fallthru
          _
      $region56: #{tpu_custom_call.1} parent=5 // pred_fallthru
        _
    $region6: #{tpu_custom_call.1} parent=1 // loop_footer
      %s18 = sadd.s32 1, %s14
    $region7: #{tpu_custom_call.1} parent=1 // loop_footer_branch
      %13 = sbr.rel target = $region3
    $region8: #{tpu_custom_call.1} parent=1 // loop_exit
      _
    %1365 = vsyncpa [#allocation4], 1
    %s1366 = scalar_lea.sflag [#allocation4], 1
    %1367 = vsyncpa %s1366, 1

</llo_original>
